<compile_context>
chip_gen: v6e
topology: v6e:2x2x1
jax: 0.10.0
libtpu: 0.0.40
codegen_flags: <defaults>
</compile_context>

<pallas_src>
import functools

import jax
import jax.numpy as jnp
from jax.experimental import pallas as pl
from jax.experimental.pallas import tpu as pltpu

EMB_DIM = 8
HIDDEN = 64
NUM_CAT = 9

# (param name, embedding dim) in concatenation order; continuous "time" (width 1) last.
FEATURE_SPECS = (
    ("user_emb", EMB_DIM),
    ("product_emb", EMB_DIM),
    ("model_emb", EMB_DIM),
    ("gender_emb", 2),
    ("age_emb", 4),
    ("residence_emb", 3),
    ("color_emb", 4),
    ("size_emb", 4),
    ("material_emb", 4),
)
IN_FEATURES = sum(d for _, d in FEATURE_SPECS) + 1  # = 46


def _round_up(x, m):
    return ((x + m - 1) // m) * m


def _deeprec_kernel(idx_ref, time_ref, ct_ref, w2t_ref, b2_ref, out_ref, *,
                    vocab_pads):
    """One batch tile of the fused forward pass (transposed layout).

    idx_ref : (9, TILE_B) int32     slab-local categorical indices (clamped)
    time_ref: (1, TILE_B) f32       continuous feature
    ct_ref  : (HIDDEN, K_PAD) f32   fused table [emb_f@W1_f ; b1 ; w1_time]^T
    w2t_ref : (1, HIDDEN) f32
    b2_ref  : (1, 1) f32
    out_ref : (1, TILE_B) f32       lane-dense sigmoid output
    """
    idx = idx_ref[...]
    tile_b = idx.shape[1]

    # Per-feature one-hot slabs: slab-local iota == idx[f].  Each slab is a
    # multiple of 8 sublanes, so the concat along the sublane axis is
    # tile-aligned and cheap.  Rows >= vocab_f are never hit (idx is clamped).
    slabs = []
    for f, vpad in enumerate(vocab_pads):
        rid = jax.lax.broadcasted_iota(jnp.int32, (vpad, tile_b), 0)
        slabs.append((rid == idx[f:f + 1, :]).astype(jnp.float32))

    # Extra 8-row slab: row 0 = 1.0 (bias), row 1 = time, rows 2..7 = 0, so the
    # bias add and the time feature ride the same MXU pass.
    rid8 = jax.lax.broadcasted_iota(jnp.int32, (8, tile_b), 0)
    extra = jnp.where(rid8 == 0, jnp.float32(1.0),
                      jnp.where(rid8 == 1, time_ref[...], jnp.float32(0.0)))
    slabs.append(extra)
    rhs = jnp.concatenate(slabs, axis=0)                      # (K_PAD, TILE_B)

    # Fused embedding lookup + Linear1 + bias + time: single MXU matmul.
    h = jnp.dot(ct_ref[...], rhs, preferred_element_type=jnp.float32)
    h = jnp.maximum(h, 0.0)                                   # ReLU
    # Dropout(0.2): identity in eval mode.

    # Linear(HIDDEN, 1): M=1 MXU dot (keeps VALU/XLU slots free).
    logits = jnp.dot(w2t_ref[...], h, preferred_element_type=jnp.float32)
    out_ref[...] = jax.nn.sigmoid(logits + b2_ref[...])       # (1, TILE_B)


def prepare_deeprec(params):
    """Fold each embedding table into its W1 row block; call ONCE per param set."""
    blocks, vocabs, vocab_pads = [], [], []
    off = 0
    for name, d in FEATURE_SPECS:
        tab = params[name]                                    # (vocab_f, d)
        blk = tab @ params["w1"][off:off + d, :]              # (vocab_f, HIDDEN)
        vpad = _round_up(tab.shape[0], 8)
        blk = jnp.pad(blk, ((0, vpad - tab.shape[0]), (0, 0)))
        blocks.append(blk)
        vocabs.append(int(tab.shape[0]))
        vocab_pads.append(vpad)
        off += d
    # Extra 8 rows: [b1 ; w1_time ; zeros] matching the kernel's extra slab.
    extra = jnp.zeros((8, HIDDEN), jnp.float32)
    extra = extra.at[0, :].set(params["b1"][0, :])
    extra = extra.at[1, :].set(params["w1"][off, :])
    blocks.append(extra)
    c = jnp.concatenate(blocks, axis=0)                       # (K_PAD, HIDDEN)
    return {
        "ct": c.T,                                            # (HIDDEN, K_PAD)
        "w2t": params["w2"].T,                                # (1, HIDDEN)
        "b2": params["b2"],                                   # (1, 1)
        "vocabs": tuple(vocabs),
        "vocab_pads": tuple(vocab_pads),
        "k_pad": int(c.shape[0]),
    }


def _choose_tile(batch, tile_b_max):
    """Lane-aligned batch tile; keep >= 2 grid steps when the batch allows it
    (so v7x's two TensorCores both get work), cap at tile_b_max."""
    b_min = _round_up(batch, 128)
    if b_min >= 256:
        tile_b = min(tile_b_max, _round_up(b_min // 2, 128))
    else:
        tile_b = b_min
    b_pad = _round_up(batch, tile_b)
    return tile_b, b_pad


def deeprec_forward(x, prep, *, tile_b_max=8192):
    """x: (B, 10) float32. Returns (B,) float32 sigmoid scores."""
    B = x.shape[0]
    vocabs = jnp.asarray(prep["vocabs"], jnp.int32)

    # Clamp like jnp.take (PyTorch nn.Embedding would raise on OOB instead).
    idx = jnp.clip(x[:, :NUM_CAT].astype(jnp.int32), 0, vocabs - 1)
    idx_t = idx.T                                             # (9, B)
    time_t = x[:, NUM_CAT:NUM_CAT + 1].T                      # (1, B)

    tile_b, b_pad = _choose_tile(B, tile_b_max)
    pad = b_pad - B
    if pad:
        idx_t = jnp.pad(idx_t, ((0, 0), (0, pad)))
        time_t = jnp.pad(time_t, ((0, 0), (0, pad)))

    k_pad = prep["k_pad"]
    kernel = functools.partial(_deeprec_kernel, vocab_pads=prep["vocab_pads"])
    out = pl.pallas_call(
        kernel,
        out_shape=jax.ShapeDtypeStruct((1, b_pad), jnp.float32),
        grid=(b_pad // tile_b,),
        in_specs=[
            pl.BlockSpec((NUM_CAT, tile_b), lambda i: (0, i)),   # idx (tiled)
            pl.BlockSpec((1, tile_b), lambda i: (0, i)),         # time (tiled)
            pl.BlockSpec((HIDDEN, k_pad), lambda i: (0, 0)),     # fused table (resident)
            pl.BlockSpec((1, HIDDEN), lambda i: (0, 0)),         # w2^T (resident)
            pl.BlockSpec((1, 1), lambda i: (0, 0)),              # b2 (resident)
        ],
        out_specs=pl.BlockSpec((1, tile_b), lambda i: (0, i)),   # lane-dense output
        compiler_params=pltpu.CompilerParams(
            dimension_semantics=("parallel",)),
    )(idx_t, time_t, prep["ct"], prep["w2t"], prep["b2"])
    return out[0, :B]


def init_params(key, vocab_sizes):
    """Deterministic synthetic parameter init (shapes match the nn.Module)."""
    keys = jax.random.split(key, 16)
    p = {}
    emb_specs = [
        ("user_emb", vocab_sizes["user_id"], EMB_DIM),
        ("product_emb", vocab_sizes["product_id"], EMB_DIM),
        ("model_emb", vocab_sizes["model_id"], EMB_DIM),
        ("gender_emb", vocab_sizes["gender"], 2),
        ("age_emb", vocab_sizes["age_group"], 4),
        ("residence_emb", vocab_sizes["residence_type"], 3),
        ("color_emb", vocab_sizes["color"], 4),
        ("size_emb", vocab_sizes["size"], 4),
        ("material_emb", vocab_sizes["material"], 4),
    ]
    for i, (name, n, d) in enumerate(emb_specs):
        p[name] = jax.random.normal(keys[i], (n, d), jnp.float32) * 0.1
    p["w1"] = jax.random.normal(keys[9], (IN_FEATURES, HIDDEN), jnp.float32) * 0.1
    p["b1"] = jax.random.normal(keys[10], (1, HIDDEN), jnp.float32) * 0.01
    p["w2"] = jax.random.normal(keys[11], (HIDDEN, 1), jnp.float32) * 0.1
    p["b2"] = jax.random.normal(keys[12], (1, 1), jnp.float32) * 0.01
    return p


def reference_forward(x, params):
    """Pure-JAX reference matching the PyTorch forward (eval mode)."""
    idx = x[:, :9].astype(jnp.int32)
    names = ["user_emb", "product_emb", "model_emb", "gender_emb", "age_emb",
             "residence_emb", "color_emb", "size_emb", "material_emb"]
    feats = [jnp.take(params[n], idx[:, i], axis=0) for i, n in enumerate(names)]
    feats.append(x[:, 9:10])
    f = jnp.concatenate(feats, axis=-1)                     # (B, 46)
    h = jnp.maximum(f @ params["w1"] + params["b1"], 0.0)
    return jax.nn.sigmoid(h @ params["w2"] + params["b2"])[:, 0]


if __name__ == "__main__":
    vocab_sizes = {
        "user_id": 50, "product_id": 30, "model_id": 20,
        "gender": 2, "age_group": 5, "residence_type": 3,
        "color": 6, "size": 5, "material": 7,
    }
    key = jax.random.PRNGKey(0)
    pkey, xkey = jax.random.split(key)
    params = init_params(pkey, vocab_sizes)
    prep = prepare_deeprec(params)                      # fold tables once

    fwd = jax.jit(functools.partial(deeprec_forward, prep=prep))

    maxes = jnp.array([vocab_sizes[k] for k in
                       ["user_id", "product_id", "model_id", "gender",
                        "age_group", "residence_type", "color", "size",
                        "material"]], dtype=jnp.int32)

    for B in (8, 300):                                  # 300 exercises grid > 1
        ki, kt = jax.random.split(jax.random.fold_in(xkey, B))
        cat = jax.random.randint(ki, (B, 9), 0, 10_000, jnp.int32) % maxes
        time_col = jax.random.uniform(kt, (B, 1), jnp.float32)
        x = jnp.concatenate([cat.astype(jnp.float32), time_col], axis=-1)  # (B, 10)

        out = fwd(x)
        jax.block_until_ready(out)

        ref = reference_forward(x, params)
        assert out.shape == (B,)
        assert jnp.allclose(out, ref, atol=1e-5, rtol=1e-5), (B, out, ref)

    print("KERNEL_OK")
</pallas_src>

<mosaic_0001>
module attributes {stable_mosaic.version = 11 : i64} {
  func.func @_deeprec_kernel(%arg0: i32, %arg1: memref<9x128xi32, #tpu.memory_space<vmem>>, %arg2: memref<1x128xf32, #tpu.memory_space<vmem>>, %arg3: memref<64x168xf32, #tpu.memory_space<vmem>>, %arg4: memref<1x64xf32, #tpu.memory_space<vmem>>, %arg5: memref<1x1xf32, #tpu.memory_space<vmem>>, %arg6: memref<1x128xf32, #tpu.memory_space<vmem>>) attributes {dimension_semantics = [#tpu.dimension_semantics<parallel>], iteration_bounds = array<i64: 1>, scalar_prefetch = 0 : i64, scratch_operands = 0 : i64, tpu.core_type = #tpu.core_type<tc>, window_params = [{transform_indices = @transform_0, window_bounds = array<i64: 9, 128>}, {transform_indices = @transform_1, window_bounds = array<i64: 1, 128>}, {pipeline_mode = #tpu.pipeline_mode<synchronous>, transform_indices = @transform_2, window_bounds = array<i64: 64, 168>}, {pipeline_mode = #tpu.pipeline_mode<synchronous>, transform_indices = @transform_3, window_bounds = array<i64: 1, 64>}, {pipeline_mode = #tpu.pipeline_mode<synchronous>, transform_indices = @transform_4, window_bounds = array<i64: 1, 1>}, {transform_indices = @transform_5, window_bounds = array<i64: 1, 128>}]} {
    %c0 = arith.constant 0 : index
    %c0_0 = arith.constant 0 : index
    %0 = vector.load %arg1[%c0, %c0_0] : memref<9x128xi32, #tpu.memory_space<vmem>>, vector<9x128xi32>
    %1 = tpu.iota {dimensions = array<i32: 0>} : vector<56x128xi32>
    %2 = vector.extract_strided_slice %0 {offsets = [0, 0], sizes = [1, 128], strides = [1, 1]} : vector<9x128xi32> to vector<1x128xi32>
    %3 = vector.broadcast %2 : vector<1x128xi32> to vector<56x128xi32>
    %4 = arith.cmpi eq, %1, %3 : vector<56x128xi32>
    %5 = arith.extui %4 : vector<56x128xi1> to vector<56x128xi32>
    %6 = arith.sitofp %5 : vector<56x128xi32> to vector<56x128xf32>
    %7 = tpu.iota {dimensions = array<i32: 0>} : vector<32x128xi32>
    %8 = vector.extract_strided_slice %0 {offsets = [1, 0], sizes = [1, 128], strides = [1, 1]} : vector<9x128xi32> to vector<1x128xi32>
    %9 = vector.broadcast %8 : vector<1x128xi32> to vector<32x128xi32>
    %10 = arith.cmpi eq, %7, %9 : vector<32x128xi32>
    %11 = arith.extui %10 : vector<32x128xi1> to vector<32x128xi32>
    %12 = arith.sitofp %11 : vector<32x128xi32> to vector<32x128xf32>
    %13 = tpu.iota {dimensions = array<i32: 0>} : vector<24x128xi32>
    %14 = vector.extract_strided_slice %0 {offsets = [2, 0], sizes = [1, 128], strides = [1, 1]} : vector<9x128xi32> to vector<1x128xi32>
    %15 = vector.broadcast %14 : vector<1x128xi32> to vector<24x128xi32>
    %16 = arith.cmpi eq, %13, %15 : vector<24x128xi32>
    %17 = arith.extui %16 : vector<24x128xi1> to vector<24x128xi32>
    %18 = arith.sitofp %17 : vector<24x128xi32> to vector<24x128xf32>
    %19 = tpu.iota {dimensions = array<i32: 0>} : vector<8x128xi32>
    %20 = vector.extract_strided_slice %0 {offsets = [3, 0], sizes = [1, 128], strides = [1, 1]} : vector<9x128xi32> to vector<1x128xi32>
    %21 = vector.broadcast %20 : vector<1x128xi32> to vector<8x128xi32>
    %22 = arith.cmpi eq, %19, %21 : vector<8x128xi32>
    %23 = arith.extui %22 : vector<8x128xi1> to vector<8x128xi32>
    %24 = arith.sitofp %23 : vector<8x128xi32> to vector<8x128xf32>
    %25 = tpu.iota {dimensions = array<i32: 0>} : vector<8x128xi32>
    %26 = vector.extract_strided_slice %0 {offsets = [4, 0], sizes = [1, 128], strides = [1, 1]} : vector<9x128xi32> to vector<1x128xi32>
    %27 = vector.broadcast %26 : vector<1x128xi32> to vector<8x128xi32>
    %28 = arith.cmpi eq, %25, %27 : vector<8x128xi32>
    %29 = arith.extui %28 : vector<8x128xi1> to vector<8x128xi32>
    %30 = arith.sitofp %29 : vector<8x128xi32> to vector<8x128xf32>
    %31 = tpu.iota {dimensions = array<i32: 0>} : vector<8x128xi32>
    %32 = vector.extract_strided_slice %0 {offsets = [5, 0], sizes = [1, 128], strides = [1, 1]} : vector<9x128xi32> to vector<1x128xi32>
    %33 = vector.broadcast %32 : vector<1x128xi32> to vector<8x128xi32>
    %34 = arith.cmpi eq, %31, %33 : vector<8x128xi32>
    %35 = arith.extui %34 : vector<8x128xi1> to vector<8x128xi32>
    %36 = arith.sitofp %35 : vector<8x128xi32> to vector<8x128xf32>
    %37 = tpu.iota {dimensions = array<i32: 0>} : vector<8x128xi32>
    %38 = vector.extract_strided_slice %0 {offsets = [6, 0], sizes = [1, 128], strides = [1, 1]} : vector<9x128xi32> to vector<1x128xi32>
    %39 = vector.broadcast %38 : vector<1x128xi32> to vector<8x128xi32>
    %40 = arith.cmpi eq, %37, %39 : vector<8x128xi32>
    %41 = arith.extui %40 : vector<8x128xi1> to vector<8x128xi32>
    %42 = arith.sitofp %41 : vector<8x128xi32> to vector<8x128xf32>
    %43 = tpu.iota {dimensions = array<i32: 0>} : vector<8x128xi32>
    %44 = vector.extract_strided_slice %0 {offsets = [7, 0], sizes = [1, 128], strides = [1, 1]} : vector<9x128xi32> to vector<1x128xi32>
    %45 = vector.broadcast %44 : vector<1x128xi32> to vector<8x128xi32>
    %46 = arith.cmpi eq, %43, %45 : vector<8x128xi32>
    %47 = arith.extui %46 : vector<8x128xi1> to vector<8x128xi32>
    %48 = arith.sitofp %47 : vector<8x128xi32> to vector<8x128xf32>
    %49 = tpu.iota {dimensions = array<i32: 0>} : vector<8x128xi32>
    %50 = vector.extract_strided_slice %0 {offsets = [8, 0], sizes = [1, 128], strides = [1, 1]} : vector<9x128xi32> to vector<1x128xi32>
    %51 = vector.broadcast %50 : vector<1x128xi32> to vector<8x128xi32>
    %52 = arith.cmpi eq, %49, %51 : vector<8x128xi32>
    %53 = arith.extui %52 : vector<8x128xi1> to vector<8x128xi32>
    %54 = arith.sitofp %53 : vector<8x128xi32> to vector<8x128xf32>
    %55 = tpu.iota {dimensions = array<i32: 0>} : vector<8x128xi32>
    %c0_i32 = arith.constant 0 : i32
    %56 = vector.broadcast %c0_i32 : i32 to vector<8x128xi32>
    %57 = arith.cmpi eq, %55, %56 : vector<8x128xi32>
    %c1_i32 = arith.constant 1 : i32
    %58 = vector.broadcast %c1_i32 : i32 to vector<8x128xi32>
    %59 = arith.cmpi eq, %55, %58 : vector<8x128xi32>
    %c0_1 = arith.constant 0 : index
    %c0_2 = arith.constant 0 : index
    %60 = vector.load %arg2[%c0_1, %c0_2] : memref<1x128xf32, #tpu.memory_space<vmem>>, vector<1x128xf32>
    %cst = arith.constant 0.000000e+00 : f32
    %61 = vector.shape_cast %60 : vector<1x128xf32> to vector<1x128xf32>
    %62 = vector.broadcast %61 : vector<1x128xf32> to vector<8x128xf32>
    %63 = vector.broadcast %cst : f32 to vector<8x128xf32>
    %64 = arith.select %59, %62, %63 : vector<8x128xi1>, vector<8x128xf32>
    %cst_3 = arith.constant 1.000000e+00 : f32
    %65 = vector.broadcast %cst_3 : f32 to vector<8x128xf32>
    %66 = arith.select %57, %65, %64 : vector<8x128xi1>, vector<8x128xf32>
    %67 = tpu.concatenate %6, %12, %18, %24, %30, %36, %42, %48, %54, %66 in 0 : vector<56x128xf32>, vector<32x128xf32>, vector<24x128xf32>, vector<8x128xf32>, vector<8x128xf32>, vector<8x128xf32>, vector<8x128xf32>, vector<8x128xf32>, vector<8x128xf32>, vector<8x128xf32> -> vector<168x128xf32>
    %c0_4 = arith.constant 0 : index
    %c0_5 = arith.constant 0 : index
    %68 = vector.load %arg3[%c0_4, %c0_5] : memref<64x168xf32, #tpu.memory_space<vmem>>, vector<64x168xf32>
    %cst_6 = arith.constant dense<0.000000e+00> : vector<64x128xf32>
    %69 = tpu.matmul %68, %67, %cst_6 {dimension_numbers = #tpu.dot_dimension_numbers<[1], [0], [0], [1], [0, 0, 1, 1], [], []>} : vector<64x168xf32>, vector<168x128xf32>, vector<64x128xf32> -> vector<64x128xf32>
    %cst_7 = arith.constant 0.000000e+00 : f32
    %70 = vector.broadcast %cst_7 : f32 to vector<64x128xf32>
    %71 = arith.maximumf %69, %70 : vector<64x128xf32>
    %c0_8 = arith.constant 0 : index
    %c0_9 = arith.constant 0 : index
    %72 = vector.load %arg4[%c0_8, %c0_9] : memref<1x64xf32, #tpu.memory_space<vmem>>, vector<1x64xf32>
    %cst_10 = arith.constant dense<0.000000e+00> : vector<1x128xf32>
    %73 = tpu.matmul %72, %71, %cst_10 {dimension_numbers = #tpu.dot_dimension_numbers<[1], [0], [0], [1], [0, 0, 1, 1], [], []>} : vector<1x64xf32>, vector<64x128xf32>, vector<1x128xf32> -> vector<1x128xf32>
    %c0_11 = arith.constant 0 : index
    %c0_12 = arith.constant 0 : index
    %74 = vector.load %arg5[%c0_11, %c0_12] : memref<1x1xf32, #tpu.memory_space<vmem>>, vector<1x1xf32>
    %75 = vector.broadcast %74 : vector<1x1xf32> to vector<1x128xf32>
    %76 = arith.addf %73, %75 : vector<1x128xf32>
    %77 = arith.negf %76 : vector<1x128xf32>
    %78 = math.exp %77 : vector<1x128xf32>
    %cst_13 = arith.constant 1.000000e+00 : f32
    %79 = vector.broadcast %cst_13 : f32 to vector<1x128xf32>
    %80 = arith.addf %79, %78 : vector<1x128xf32>
    %81 = arith.divf %79, %80 : vector<1x128xf32>
    %c0_14 = arith.constant 0 : index
    %c0_15 = arith.constant 0 : index
    %82 = vector.load %arg6[%c0_14, %c0_15] : memref<1x128xf32, #tpu.memory_space<vmem>>, vector<1x128xf32>
    tpu.vector_store %arg6[%c0_14, %c0_15], %81 {strides = array<i32>} : memref<1x128xf32, #tpu.memory_space<vmem>>, vector<1x128xf32>,
    return
  }
  func.func @transform_0(%arg0: i32) -> (i32, i32) {
    %c0_i32 = arith.constant 0 : i32
    %c0_i32_0 = arith.constant 0 : i32
    return %c0_i32, %arg0 : i32, i32
  }
  func.func @transform_1(%arg0: i32) -> (i32, i32) {
    %c0_i32 = arith.constant 0 : i32
    %c0_i32_0 = arith.constant 0 : i32
    return %c0_i32, %arg0 : i32, i32
  }
  func.func @transform_2(%arg0: i32) -> (i32, i32) {
    %c0_i32 = arith.constant 0 : i32
    %c0_i32_0 = arith.constant 0 : i32
    %c0_i32_1 = arith.constant 0 : i32
    return %c0_i32, %c0_i32_0 : i32, i32
  }
  func.func @transform_3(%arg0: i32) -> (i32, i32) {
    %c0_i32 = arith.constant 0 : i32
    %c0_i32_0 = arith.constant 0 : i32
    %c0_i32_1 = arith.constant 0 : i32
    return %c0_i32, %c0_i32_0 : i32, i32
  }
  func.func @transform_4(%arg0: i32) -> (i32, i32) {
    %c0_i32 = arith.constant 0 : i32
    %c0_i32_0 = arith.constant 0 : i32
    %c0_i32_1 = arith.constant 0 : i32
    return %c0_i32, %c0_i32_0 : i32, i32
  }
  func.func @transform_5(%arg0: i32) -> (i32, i32) {
    %c0_i32 = arith.constant 0 : i32
    %c0_i32_0 = arith.constant 0 : i32
    return %c0_i32, %arg0 : i32, i32
  }
}

</mosaic_0001>

<llo_original>
// kernel: deeprec_forward.1
$region0: #{deeprec_forward.1}
  #allocation0 [shape = 'u32[]', space=smem, size = 0x4, offset = 0x4, fixed_abs, tag = 'smem constant byte address 0x4 - core index']
  #allocation1 [shape = 'u32[144,128]{1,0:T(1,128)}', space=vmem, size = 0x12000, scoped, tag = 'internal scratch']
  #allocation2 [shape = 'f32[1,1]{1,0:T(1,128)S(1)}', space=vmem, size = 0x200, scoped, tag = 'scoped memory for deeprec_forward.1']
  %s0 = inlined_call_operand.vmem [shape: s32[9,128], index: 0, kind: input, shape index: {}]
  %s1 = inlined_call_operand.vmem [shape: f32[1,128], index: 1, kind: input, shape index: {}]
  %s2 = inlined_call_operand.hbm [shape: f32[64,168], index: 2, kind: input, shape index: {}]
  %s3 = inlined_call_operand.vmem [shape: f32[1,64], index: 3, kind: input, shape index: {}]
  %s4 = inlined_call_operand.<no memory space> [shape: f32[1,1], index: 4, kind: input, shape index: {}]
  %s5 = inlined_call_operand.vmem [shape: f32[1,128], index: 5, kind: output, shape index: {}]
  %s6 = sld [smem:[#allocation0]]
  $region34: #{deeprec_forward.1} parent=0
    _
  %s8 = ssub.s32 1, %s6
  %s9 = scalar_select 0, %s8, %s6
  %v10 = vstv %s4
  %11 = vst [vmem:[#allocation2] sm:$0x1] %v10
  $region1: #{deeprec_forward.1} parent=0
    #allocation3 [shape = 'u8[65536]{0}', space=vmem, size = 0x10000, scoped, tag = 'input window, operand 2, single buffered']
    #allocation4 [shape = 's32[1]{0}', space=sflag, size = 0x4, scoped, tag = 'scoped memory for deeprec_forward.1']
    %12 = vsyncpa [#allocation4], 0
    // Predicated region
    $region2: #{deeprec_forward.1} parent=1 // pred_check
      _
    $region3: #{deeprec_forward.1} parent=1 // pred_check_branch
      %14 = sbr.rel (0) target = $region5
    $region4: #{deeprec_forward.1} parent=1 // pred_region
      _
    $region5: #{deeprec_forward.1} parent=1 // pred_fallthru
      _
    // Predicated region
    $region6: #{deeprec_forward.1} parent=1 // pred_check
      _
    $region7: #{deeprec_forward.1} parent=1 // pred_check_branch
      %16 = sbr.rel (0) target = $region9
    $region8: #{deeprec_forward.1} parent=1 // pred_region
      _
    $region9: #{deeprec_forward.1} parent=1 // pred_fallthru
      _
    // Predicated region
    $region10: #{deeprec_forward.1} parent=1 // pred_check
      _
    $region11: #{deeprec_forward.1} parent=1 // pred_check_branch
      %18 = sbr.rel (0) target = $region13
    $region12: #{deeprec_forward.1} parent=1 // pred_region
      %s20 = ssub.s32 2048, 2048
      %21 = vsyncadd [#allocation4], %s20
      %s22 = sshll.u32 [#allocation3], 4
      %s23 = int_to_ptr.vmem [resolvable:$true] %s22
      %28 = dma.hbm_to_vmem [thread:$0]  %s2, 2048, %s23, [#allocation4], 256, 256, 16
    $region13: #{deeprec_forward.1} parent=1 // pred_fallthru
      _
    // Predicated region
    $region14: #{deeprec_forward.1} parent=1 // pred_check
      _
    $region15: #{deeprec_forward.1} parent=1 // pred_check_branch
      %30 = sbr.rel (0) target = $region17
    $region16: #{deeprec_forward.1} parent=1 // pred_region
      _
    $region17: #{deeprec_forward.1} parent=1 // pred_fallthru
      _
    // Predicated region
    $region18: #{deeprec_forward.1} parent=1 // pred_check
      _
    $region19: #{deeprec_forward.1} parent=1 // pred_check_branch
      %32 = sbr.rel (0) target = $region21
    $region20: #{deeprec_forward.1} parent=1 // pred_region
      _
    $region21: #{deeprec_forward.1} parent=1 // pred_fallthru
      _
    // Predicated region
    $region22: #{deeprec_forward.1} parent=1 // pred_check
      _
    $region23: #{deeprec_forward.1} parent=1 // pred_check_branch
      %34 = sbr.rel (0) target = $region25
    $region24: #{deeprec_forward.1} parent=1 // pred_region
      %35 = dma.done [#allocation4], 2048
    $region25: #{deeprec_forward.1} parent=1 // pred_fallthru
      _
    %v36 = vld [vmem:[%s0] sm:$0xff]
    %v37 = vld [vmem:[%s0 + $0x8] sm:$0x1]
    %v38 = vlaneseq
    %v39 = vshrl.u32 %v38, 7
    %v40 = vadd.s32 %v39, 8
    %v41 = vadd.s32 %v39, 16
    %v42 = vadd.s32 %v39, 24
    %v43 = vadd.s32 %v39, 32
    %v44 = vadd.s32 %v39, 40
    %v45 = vadd.s32 %v39, 48
    %v46 = vlaneseq
    %v47 = vshrl.u32 %v46, 7
    %v48 = vsub.s32 0, %v47
    %v49 = vrot.slane %v36, %v48
    %vm50 = vcmp.eq.s32.totalorder %v39, %v49
    %vm51 = vcmp.eq.s32.totalorder %v40, %v49
    %vm52 = vcmp.eq.s32.totalorder %v41, %v49
    %vm53 = vcmp.eq.s32.totalorder %v42, %v49
    %vm54 = vcmp.eq.s32.totalorder %v43, %v49
    %vm55 = vcmp.eq.s32.totalorder %v44, %v49
    %vm56 = vcmp.eq.s32.totalorder %v45, %v49
    %v57 = vsel %vm50, 1, 0
    %v58 = vsel %vm51, 1, 0
    %v59 = vsel %vm52, 1, 0
    %v60 = vsel %vm53, 1, 0
    %v61 = vsel %vm54, 1, 0
    %v62 = vsel %vm55, 1, 0
    %v63 = vsel %vm56, 1, 0
    %v64 = vcvt.s32.f32 %v57
    %v65 = vcvt.s32.f32 %v58
    %v66 = vcvt.s32.f32 %v59
    %v67 = vcvt.s32.f32 %v60
    %v68 = vcvt.s32.f32 %v61
    %v69 = vcvt.s32.f32 %v62
    %v70 = vcvt.s32.f32 %v63
    %v71 = vlaneseq
    %v72 = vshrl.u32 %v71, 7
    %v73 = vsub.s32 1, %v72
    %v74 = vrot.slane %v36, %v73
    %vm75 = vcmp.eq.s32.totalorder %v39, %v74
    %vm76 = vcmp.eq.s32.totalorder %v40, %v74
    %vm77 = vcmp.eq.s32.totalorder %v41, %v74
    %vm78 = vcmp.eq.s32.totalorder %v42, %v74
    %v79 = vsel %vm75, 1, 0
    %v80 = vsel %vm76, 1, 0
    %v81 = vsel %vm77, 1, 0
    %v82 = vsel %vm78, 1, 0
    %v83 = vcvt.s32.f32 %v79
    %v84 = vcvt.s32.f32 %v80
    %v85 = vcvt.s32.f32 %v81
    %v86 = vcvt.s32.f32 %v82
    %v87 = vlaneseq
    %v88 = vshrl.u32 %v87, 7
    %v89 = vsub.s32 2, %v88
    %v90 = vrot.slane %v36, %v89
    %vm91 = vcmp.eq.s32.totalorder %v39, %v90
    %vm92 = vcmp.eq.s32.totalorder %v40, %v90
    %vm93 = vcmp.eq.s32.totalorder %v41, %v90
    %v94 = vsel %vm91, 1, 0
    %v95 = vsel %vm92, 1, 0
    %v96 = vsel %vm93, 1, 0
    %v97 = vcvt.s32.f32 %v94
    %v98 = vcvt.s32.f32 %v95
    %v99 = vcvt.s32.f32 %v96
    %v100 = vlaneseq
    %v101 = vshrl.u32 %v100, 7
    %v102 = vsub.s32 3, %v101
    %v103 = vrot.slane %v36, %v102
    %vm104 = vcmp.eq.s32.totalorder %v39, %v103
    %v105 = vsel %vm104, 1, 0
    %v106 = vcvt.s32.f32 %v105
    %v107 = vlaneseq
    %v108 = vshrl.u32 %v107, 7
    %v109 = vsub.s32 4, %v108
    %v110 = vrot.slane %v36, %v109
    %vm111 = vcmp.eq.s32.totalorder %v39, %v110
    %v112 = vsel %vm111, 1, 0
    %v113 = vcvt.s32.f32 %v112
    %v114 = vlaneseq
    %v115 = vshrl.u32 %v114, 7
    %v116 = vsub.s32 5, %v115
    %v117 = vrot.slane %v36, %v116
    %vm118 = vcmp.eq.s32.totalorder %v39, %v117
    %v119 = vsel %vm118, 1, 0
    %v120 = vcvt.s32.f32 %v119
    %v121 = vlaneseq
    %v122 = vshrl.u32 %v121, 7
    %v123 = vsub.s32 6, %v122
    %v124 = vrot.slane %v36, %v123
    %vm125 = vcmp.eq.s32.totalorder %v39, %v124
    %v126 = vsel %vm125, 1, 0
    %v127 = vcvt.s32.f32 %v126
    %v128 = vlaneseq
    %v129 = vshrl.u32 %v128, 7
    %v130 = vsub.s32 7, %v129
    %v131 = vrot.slane %v36, %v130
    %vm132 = vcmp.eq.s32.totalorder %v39, %v131
    %v133 = vsel %vm132, 1, 0
    %v134 = vcvt.s32.f32 %v133
    %v135 = vlaneseq
    %v136 = vshrl.u32 %v135, 7
    %v137 = vsub.s32 0, %v136
    %v138 = vrot.slane %v37, %v137
    %vm139 = vcmp.eq.s32.totalorder %v39, %v138
    %v140 = vsel %vm139, 1, 0
    %v141 = vcvt.s32.f32 %v140
    %vm142 = vcmp.eq.s32.totalorder %v39, 0
    %vm143 = vcmp.eq.s32.totalorder %v39, 1
    %v144 = vld [vmem:[%s1] sm:$0x1]
    %v146 = vlaneseq
    %v147 = vshrl.u32 %v146, 7
    %v148 = vsub.s32 0, %v147
    %v149 = vrot.slane %v144, %v148
    %v151 = vsel %vm143, %v149, 0.0
    %v152 = vsel %vm142, 1.0, %v151
    %v153 = vld [vmem:[#allocation3] sm:$0xff]
    %v154 = vld [vmem:[#allocation3 + $0x8] sm:$0xff]
    %v155 = vld [vmem:[#allocation3 + $0x10] sm:$0xff]
    %v156 = vld [vmem:[#allocation3 + $0x18] sm:$0xff]
    %v157 = vld [vmem:[#allocation3 + $0x20] sm:$0xff]
    %v158 = vld [vmem:[#allocation3 + $0x28] sm:$0xff]
    %v159 = vld [vmem:[#allocation3 + $0x30] sm:$0xff]
    %v160 = vld [vmem:[#allocation3 + $0x38] sm:$0xff]
    %v161 = vld [vmem:[#allocation3 + $0x40] sm:$0xff]
    %v162 = vld [vmem:[#allocation3 + $0x48] sm:$0xff]
    %v163 = vld [vmem:[#allocation3 + $0x50] sm:$0xff]
    %v164 = vld [vmem:[#allocation3 + $0x58] sm:$0xff]
    %v165 = vld [vmem:[#allocation3 + $0x60] sm:$0xff]
    %v166 = vld [vmem:[#allocation3 + $0x68] sm:$0xff]
    %v167 = vld [vmem:[#allocation3 + $0x70] sm:$0xff]
    %v168 = vld [vmem:[#allocation3 + $0x78] sm:$0xff]
    %vm169 = vcmask 326656
    %v171 = vsel %vm169, %v154, 0
    %v174 = vsel %vm169, %v156, 0
    %v177 = vsel %vm169, %v158, 0
    %v180 = vsel %vm169, %v160, 0
    %v183 = vsel %vm169, %v162, 0
    %v186 = vsel %vm169, %v164, 0
    %v189 = vsel %vm169, %v166, 0
    %v192 = vsel %vm169, %v168, 0
    %194 = vmatprep.subr.mxu0 0.0
    %195 = vmatpush1.msra.mxu0 %v113
    %196 = vmatprep.subr.mxu0 0.0
    %197 = vmatpush1.msra.mxu0 %v106
    %198 = vmatprep.subr.mxu0 0.0
    %199 = vmatpush1.msra.mxu0 %v99
    %200 = vmatprep.subr.mxu0 0.0
    %201 = vmatpush1.msra.mxu0 %v98
    %202 = vmatprep.subr.mxu0 0.0
    %203 = vmatpush1.msra.mxu0 %v97
    %204 = vmatprep.subr.mxu0 0.0
    %205 = vmatpush1.msra.mxu0 %v86
    %206 = vmatprep.subr.mxu0 0.0
    %207 = vmatpush1.msra.mxu0 %v85
    %208 = vmatprep.subr.mxu0 0.0
    %209 = vmatpush1.msra.mxu0 %v84
    %210 = vmatprep.subr.mxu0 0.0
    %211 = vmatpush1.msra.mxu0 %v83
    %212 = vmatprep.subr.mxu0 0.0
    %213 = vmatpush1.msra.mxu0 %v70
    %214 = vmatprep.subr.mxu0 0.0
    %215 = vmatpush1.msra.mxu0 %v69
    %216 = vmatprep.subr.mxu0 0.0
    %217 = vmatpush1.msra.mxu0 %v68
    %218 = vmatprep.subr.mxu0 0.0
    %219 = vmatpush1.msra.mxu0 %v67
    %220 = vmatprep.subr.mxu0 0.0
    %221 = vmatpush1.msra.mxu0 %v66
    %222 = vmatprep.subr.mxu0 0.0
    %223 = vmatpush1.msra.mxu0 %v65
    %224 = vmatprep.subr.mxu0 0.0
    %225 = vmatpush1.msra.mxu0 %v64
    %226 = vmatprep.subr.mxu0 0.0
    %227 = vmatpush2.msra.mxu0 0.0
    %228 = vmatprep.subr.mxu0 0.0
    %229 = vmatpush2.msra.mxu0 0.0
    %230 = vmatprep.subr.mxu0 0.0
    %231 = vmatpush2.msra.mxu0 0.0
    %232 = vmatprep.subr.mxu0 0.0
    %233 = vmatpush2.msra.mxu0 0.0
    %234 = vmatprep.subr.mxu0 0.0
    %235 = vmatpush2.msra.mxu0 0.0
    %236 = vmatprep.subr.mxu0 0.0
    %237 = vmatpush2.msra.mxu0 0.0
    %238 = vmatprep.subr.mxu0 0.0
    %239 = vmatpush2.msra.mxu0 0.0
    %240 = vmatprep.subr.mxu0 0.0
    %241 = vmatpush2.msra.mxu0 0.0
    %242 = vmatprep.subr.mxu0 0.0
    %243 = vmatpush2.msra.mxu0 0.0
    %244 = vmatprep.subr.mxu0 0.0
    %245 = vmatpush2.msra.mxu0 0.0
    %246 = vmatprep.subr.mxu0 0.0
    %247 = vmatpush2.msra.mxu0 0.0
    %248 = vmatprep.subr.mxu0 0.0
    %249 = vmatpush2.msra.mxu0 %v152
    %250 = vmatprep.subr.mxu0 0.0
    %251 = vmatpush2.msra.mxu0 %v141
    %252 = vmatprep.subr.mxu0 0.0
    %253 = vmatpush2.msra.mxu0 %v134
    %254 = vmatprep.subr.mxu0 0.0
    %255 = vmatpush2.msra.mxu0 %v127
    %256 = vmatprep.subr.mxu0 0.0
    %257 = vmatpush2.msra.mxu0 %v120
    %258 = vmatprep.mubr.f32.mxu0 %v171
    %259 = vmatmul.mubr.f32.gmra.mxu0 %v153
    %v260 = vpop.f32.mrf.mxu0
    %v261 = vadd.f32 0.0, %v260
    %v262 = vpop.f32.mrf.mxu0
    %263 = vmatprep.mubr.f32.mxu0 %v174
    %264 = vmatmul.mubr.f32.gmra.mxu0 %v155
    %v265 = vpop.f32.mrf.mxu0
    %v266 = vadd.f32 0.0, %v265
    %v267 = vpop.f32.mrf.mxu0
    %268 = vmatprep.mubr.f32.mxu0 %v177
    %269 = vmatmul.mubr.f32.gmra.mxu0 %v157
    %v270 = vpop.f32.mrf.mxu0
    %v271 = vadd.f32 0.0, %v270
    %v272 = vpop.f32.mrf.mxu0
    %273 = vmatprep.mubr.f32.mxu0 %v180
    %274 = vmatmul.mubr.f32.gmra.mxu0 %v159
    %v275 = vpop.f32.mrf.mxu0
    %v276 = vadd.f32 0.0, %v275
    %v277 = vpop.f32.mrf.mxu0
    %278 = vmatprep.mubr.f32.mxu0 %v183
    %279 = vmatmul.mubr.f32.gmra.mxu0 %v161
    %v280 = vpop.f32.mrf.mxu0
    %v281 = vadd.f32 0.0, %v280
    %v282 = vpop.f32.mrf.mxu0
    %283 = vmatprep.mubr.f32.mxu0 %v186
    %284 = vmatmul.mubr.f32.gmra.mxu0 %v163
    %v285 = vpop.f32.mrf.mxu0
    %v286 = vadd.f32 0.0, %v285
    %v287 = vpop.f32.mrf.mxu0
    %288 = vmatprep.mubr.f32.mxu0 %v189
    %289 = vmatmul.mubr.f32.gmra.mxu0 %v165
    %v290 = vpop.f32.mrf.mxu0
    %v291 = vadd.f32 0.0, %v290
    %v292 = vpop.f32.mrf.mxu0
    %293 = vmatprep.mubr.f32.mxu0 %v192
    %294 = vmatmul.mubr.f32.gmra.mxu0 %v167
    %v295 = vpop.f32.mrf.mxu0
    %v296 = vadd.f32 0.0, %v295
    %v297 = vpop.f32.mrf.mxu0
    %298 = vdwg.mxu0
    %v299 = vmax.f32 %v261, 0.0
    %v300 = vmax.f32 %v266, 0.0
    %v301 = vmax.f32 %v271, 0.0
    %v302 = vmax.f32 %v276, 0.0
    %v303 = vmax.f32 %v281, 0.0
    %v304 = vmax.f32 %v286, 0.0
    %v305 = vmax.f32 %v291, 0.0
    %v306 = vmax.f32 %v296, 0.0
    %v307 = vld [vmem:[%s3] sm:$0x1]
    %v308 = vld [vmem:[#allocation2] sm:$0x1]
    %310 = vset.pattern.permute.xlu0 0
    %311 = vperm.xlu0 %310, %v308
    %v312 = vpop.permute.xlu0 %311
    %v314 = vlaneseq
    %v315 = vshrl.u32 %v314, 7
    %v316 = vsub.s32 0, %v315
    %v317 = vrot.slane %v312, %v316
    %vm318 = vcmask 523264
    %v320 = vsel %vm318, %v307, 0
    %322 = vmatprep.subr.mxu0 0.0
    %323 = vmatpush1.msra.mxu0 0.0
    %324 = vmatprep.subr.mxu0 0.0
    %325 = vmatpush1.msra.mxu0 0.0
    %326 = vmatprep.subr.mxu0 0.0
    %327 = vmatpush1.msra.mxu0 0.0
    %328 = vmatprep.subr.mxu0 0.0
    %329 = vmatpush1.msra.mxu0 0.0
    %330 = vmatprep.subr.mxu0 0.0
    %331 = vmatpush1.msra.mxu0 0.0
    %332 = vmatprep.subr.mxu0 0.0
    %333 = vmatpush1.msra.mxu0 0.0
    %334 = vmatprep.subr.mxu0 0.0
    %335 = vmatpush1.msra.mxu0 0.0
    %336 = vmatprep.subr.mxu0 0.0
    %337 = vmatpush1.msra.mxu0 0.0
    %338 = vmatprep.subr.mxu0 0.0
    %339 = vmatpush1.msra.mxu0 %v306
    %340 = vmatprep.subr.mxu0 0.0
    %341 = vmatpush1.msra.mxu0 %v305
    %342 = vmatprep.subr.mxu0 0.0
    %343 = vmatpush1.msra.mxu0 %v304
    %344 = vmatprep.subr.mxu0 0.0
    %345 = vmatpush1.msra.mxu0 %v303
    %346 = vmatprep.subr.mxu0 0.0
    %347 = vmatpush1.msra.mxu0 %v302
    %348 = vmatprep.subr.mxu0 0.0
    %349 = vmatpush1.msra.mxu0 %v301
    %350 = vmatprep.subr.mxu0 0.0
    %351 = vmatpush1.msra.mxu0 %v300
    %352 = vmatprep.subr.mxu0 0.0
    %353 = vmatpush1.msra.mxu0 %v299
    %354 = vmatprep.subr.mxu0 0.0
    %355 = vmatpush2.msra.mxu0 0.0
    %356 = vmatprep.subr.mxu0 0.0
    %357 = vmatpush2.msra.mxu0 0.0
    %358 = vmatprep.subr.mxu0 0.0
    %359 = vmatpush2.msra.mxu0 0.0
    %360 = vmatprep.subr.mxu0 0.0
    %361 = vmatpush2.msra.mxu0 0.0
    %362 = vmatprep.subr.mxu0 0.0
    %363 = vmatpush2.msra.mxu0 0.0
    %364 = vmatprep.subr.mxu0 0.0
    %365 = vmatpush2.msra.mxu0 0.0
    %366 = vmatprep.subr.mxu0 0.0
    %367 = vmatpush2.msra.mxu0 0.0
    %368 = vmatprep.subr.mxu0 0.0
    %369 = vmatpush2.msra.mxu0 0.0
    %370 = vmatprep.subr.mxu0 0.0
    %371 = vmatpush2.msra.mxu0 0.0
    %372 = vmatprep.subr.mxu0 0.0
    %373 = vmatpush2.msra.mxu0 0.0
    %374 = vmatprep.subr.mxu0 0.0
    %375 = vmatpush2.msra.mxu0 0.0
    %376 = vmatprep.subr.mxu0 0.0
    %377 = vmatpush2.msra.mxu0 0.0
    %378 = vmatprep.subr.mxu0 0.0
    %379 = vmatpush2.msra.mxu0 0.0
    %380 = vmatprep.subr.mxu0 0.0
    %381 = vmatpush2.msra.mxu0 0.0
    %382 = vmatprep.subr.mxu0 0.0
    %383 = vmatpush2.msra.mxu0 0.0
    %384 = vmatprep.subr.mxu0 0.0
    %385 = vmatpush2.msra.mxu0 0.0
    %386 = vmatprep.mubr.f32.mxu0 0.0
    %387 = vmatmul.mubr.f32.gmra.mxu0 %v320
    %v388 = vpop.f32.mrf.mxu0
    %v389 = vadd.f32 %v317, %v388
    %v390 = vpop.f32.mrf.mxu0
    %391 = vdwg.mxu0
    %v392 = vxor.u32 %v389, 2147483648
    %v393 = vmul.f32 %v392, 1.442695
    %v394 = vpow.pop %v393
    %v395 = vadd.f32 %v394, 1.0
    %v396 = vrcp.pop %v395
    %v397 = vmul.f32 1.0, %v396
    %398 = vst [vmem:[%s5] sm:$0x1] %v397
    // Predicated region
    $region26: #{deeprec_forward.1} parent=1 // pred_check
      _
    $region27: #{deeprec_forward.1} parent=1 // pred_check_branch
      %400 = sbr.rel (0) target = $region29
    $region28: #{deeprec_forward.1} parent=1 // pred_region
      _
    $region29: #{deeprec_forward.1} parent=1 // pred_fallthru
      _
    // Predicated region
    $region30: #{deeprec_forward.1} parent=1 // pred_check
      _
    $region31: #{deeprec_forward.1} parent=1 // pred_check_branch
      %402 = sbr.rel (0) target = $region33
    $region32: #{deeprec_forward.1} parent=1 // pred_region
      _
    $region33: #{deeprec_forward.1} parent=1 // pred_fallthru
      _
    %403 = vsyncpa [#allocation4], 1

</llo_original>
